<compile_context>
chip_gen: v5e
topology: v5e:2x2
jax: 0.10.0
libtpu: 0.0.40
codegen_flags: <defaults>
</compile_context>

<pallas_src>
import functools

import jax
import jax.numpy as jnp
from jax import lax
from jax.experimental import pallas as pl
from jax.experimental.pallas import tpu as pltpu


def _round_up(n, m):
    return (n + m - 1) // m * m


def _frozen_hopfield_kernel(x_ref, proj_ref, emb_ref, einv_ref, out_ref,
                            xp_scr, l_scr, acc_scr, *, beta, n_pad_v):
    """Grid = (batch_tiles, vocab_tiles); vocab axis is the (arbitrary) reduction axis."""
    v = pl.program_id(1)
    nv = pl.num_programs(1)

    @pl.when(v == 0)
    def _init():
        # Projection (TB, Din) x (E, Din) -> (TB, E); bf16 operands, f32 accumulation.
        xp = lax.dot_general(x_ref[...], proj_ref[...], (((1,), (1,)), ((), ())),
                             preferred_element_type=jnp.float32)
        # Fold beta and 1/||xp|| into the rows so the sim matmul yields beta*cos directly.
        # (eps placement differs trivially from the reference's `+1e-8` on the norm
        #  product; only matters for exactly-zero rows.)
        inv = beta * lax.rsqrt(jnp.sum(xp * xp, axis=-1, keepdims=True) + 1e-12)
        xp_scr[...] = (xp * inv).astype(jnp.bfloat16)
        l_scr[...] = jnp.zeros_like(l_scr)
        acc_scr[...] = jnp.zeros_like(acc_scr)

    # (TB, E) x (TV, E) -> (TB, TV) raw dot products with the *raw* embedding tile.
    s_raw = lax.dot_general(xp_scr[...], emb_ref[...], (((1,), (1,)), ((), ())),
                            preferred_element_type=jnp.float32)
    # Per-column 1/||emb_v|| scaling (one broadcast VPU multiply) -> s = beta * cosine.
    s = s_raw * einv_ref[...]

    # Fixed-max softmax: |cosine| <= 1 so s <= beta (up to bf16 rounding; exp values
    # marginally > 1 are harmless for the normalization).
    # TODO(synk): on v6e/v7x the EUP has a bf16 path; compute exp in bf16 if profiling
    # shows the (TB, TV) exp as the binding slot (keep f32 on v5e).
    p = jnp.exp(s - beta)
    l_scr[...] += jnp.sum(p, axis=-1, keepdims=True)
    acc_scr[...] += jnp.dot(p.astype(jnp.bfloat16), emb_ref[...],
                            preferred_element_type=jnp.float32)

    @pl.when(v == nv - 1)
    def _finalize():
        l = l_scr[...]
        if n_pad_v:
            # Zero-padded vocab rows have s == 0 exactly (zero emb row and einv == 0),
            # so each contributed exp(-beta) to l and nothing to acc; remove that
            # contribution for an exact softmax denominator over the real vocabulary.
            l = l - jnp.float32(n_pad_v) * jnp.exp(jnp.float32(-beta))
        out_ref[...] = (acc_scr[...] / l).astype(out_ref.dtype)


def prepare_frozen_hopfield_embeddings(embeddings, *, block_v=None):
    """One-time preprocessing of the frozen embedding buffer.

    Pads (V, E) -> (V_pad, E_pad) with zeros (E_pad multiple of 128, V_pad multiple of
    the vocab tile), casts to bf16, and precomputes per-row inverse norms.  Cache the
    returned dict across forward calls (embeddings are a frozen buffer in the module).
    """
    V, E = embeddings.shape
    E_pad = _round_up(max(E, 128), 128)
    if block_v is None:
        block_v = 1024
    block_v = min(_round_up(block_v, 128), _round_up(max(V, 128), 128))
    V_pad = _round_up(max(V, block_v), block_v)

    emb = embeddings.astype(jnp.float32)
    einv = lax.rsqrt(jnp.sum(emb * emb, axis=-1) + 1e-12)

    emb_p = jnp.zeros((V_pad, E_pad), jnp.bfloat16).at[:V, :E].set(emb.astype(jnp.bfloat16))
    einv_p = jnp.zeros((1, V_pad), jnp.float32).at[0, :V].set(einv)
    return {"emb": emb_p, "einv": einv_p, "V": V, "E": E,
            "V_pad": V_pad, "E_pad": E_pad, "block_v": block_v}


def _choose_block_b(B, block_b):
    if block_b is not None:
        assert B % block_b == 0, "B must be divisible by block_b"
        return block_b
    # v7x has 2 TensorCores/chip: shard the batch into exactly two "parallel" tiles when
    # possible.  Single-TC v5e/v6e keep one tile so the embedding table is streamed once.
    n_tiles = 1
    try:
        if "7" in jax.devices()[0].device_kind:
            n_tiles = 2
    except Exception:
        pass
    cap = 1024  # keep the per-batch-tile x/out/scratch working set modest for huge B
    if n_tiles == 2 and B % 16 == 0 and B // 2 <= cap:
        return B // 2
    if B <= cap:
        return B
    bb = cap
    while bb >= 8:
        if B % bb == 0:
            return bb
        bb -= 8
    return B  # single full-B tile (full-dim blocks are exempt from the 8-row rule)


def frozen_hopfield(x, rand_proj, embeddings=None, beta=1.0, *, prepared=None,
                    block_b=None, block_v=None, emb_buffers=2,
                    vmem_limit_bytes=48 * 1024 * 1024):
    """x: (B, input_dim); rand_proj: (E, input_dim); embeddings: (V, E) -> (B, E) f32.

    Pass `prepared=prepare_frozen_hopfield_embeddings(embeddings)` to amortize the
    frozen-embedding preprocessing across calls (then `embeddings` may be None).
    """
    if prepared is None:
        assert embeddings is not None
        prepared = prepare_frozen_hopfield_embeddings(embeddings, block_v=block_v)

    B, d_in = x.shape
    E, d_in2 = rand_proj.shape
    assert d_in == d_in2
    assert E == prepared["E"], "rand_proj embedding dim must match prepared embeddings"

    E_pad, V_pad, block_v = prepared["E_pad"], prepared["V_pad"], prepared["block_v"]
    n_pad_v = V_pad - prepared["V"]
    d_pad = _round_up(max(d_in, 128), 128)
    block_b = _choose_block_b(B, block_b)

    # Per-call inputs: zero-pad to lane-aligned shapes and cast to bf16 (MXU dtype,
    # half the DMA bytes vs f32).  Zero padding leaves xp, its norm and the output
    # unchanged on the real E/d_in columns.
    x_b = jnp.zeros((B, d_pad), jnp.bfloat16).at[:, :d_in].set(x.astype(jnp.bfloat16))
    proj_b = jnp.zeros((E_pad, d_pad), jnp.bfloat16).at[:E, :d_in].set(
        rand_proj.astype(jnp.bfloat16))

    kernel = functools.partial(_frozen_hopfield_kernel, beta=float(beta),
                               n_pad_v=int(n_pad_v))

    emb_spec_kwargs = {}
    if emb_buffers is not None and emb_buffers > 2:
        # Deeper multi-buffering on the dominant stream if profiling shows exposed DMA.
        emb_spec_kwargs["pipeline_mode"] = pl.Buffered(int(emb_buffers))

    out_pad = pl.pallas_call(
        kernel,
        out_shape=jax.ShapeDtypeStruct((B, E_pad), jnp.float32),
        grid_spec=pltpu.PrefetchScalarGridSpec(
            num_scalar_prefetch=0,
            grid=(B // block_b, V_pad // block_v),
            in_specs=[
                pl.BlockSpec((block_b, d_pad), lambda b, v: (b, 0)),          # x (bf16)
                pl.BlockSpec((E_pad, d_pad), lambda b, v: (0, 0)),            # proj (bf16)
                pl.BlockSpec((block_v, E_pad), lambda b, v: (v, 0),           # emb (bf16)
                             **emb_spec_kwargs),
                pl.BlockSpec((1, block_v), lambda b, v: (0, v)),              # 1/||emb||
            ],
            out_specs=pl.BlockSpec((block_b, E_pad), lambda b, v: (b, 0)),
            scratch_shapes=[
                pltpu.VMEM((block_b, E_pad), jnp.bfloat16),   # beta-scaled normalized xp
                pltpu.VMEM((block_b, 1), jnp.float32),        # softmax denominator l
                pltpu.VMEM((block_b, E_pad), jnp.float32),    # running numerator acc
            ],
        ),
        compiler_params=pltpu.CompilerParams(
            dimension_semantics=("parallel", "arbitrary"),
            vmem_limit_bytes=vmem_limit_bytes,
        ),
    )(x_b, proj_b, prepared["emb"], prepared["einv"])

    return out_pad[:, :E]


def frozen_hopfield_ref(x, rand_proj, embeddings, beta):
    xp = x @ rand_proj.T
    x_norm = jnp.linalg.norm(xp, axis=-1, keepdims=True)
    e_norm = jnp.linalg.norm(embeddings, axis=-1, keepdims=True)
    sim = (xp @ embeddings.T) / (x_norm @ e_norm.T + 1e-8)
    softm = jax.nn.softmax(beta * sim, axis=-1)
    return softm @ embeddings


if __name__ == "__main__":
    # Small shapes consistent with the module, sized to exercise both grid axes
    # (2 batch tiles x 4 vocab tiles after padding E/d_in to 128).
    B = 16
    input_dim = 64
    embedding_dim = 32
    vocab = 512
    beta = 2.0

    key = jax.random.PRNGKey(0)
    k_x, k_proj, k_emb = jax.random.split(key, 3)

    x = jax.random.normal(k_x, (B, input_dim), dtype=jnp.float32)
    rand_proj = (1.0 / jnp.sqrt(embedding_dim)) * jax.random.normal(
        k_proj, (embedding_dim, input_dim), dtype=jnp.float32)
    embeddings = jax.random.normal(k_emb, (vocab, embedding_dim), dtype=jnp.float32)

    # Frozen-buffer preprocessing done once, reused across calls.
    prep = prepare_frozen_hopfield_embeddings(embeddings, block_v=128)

    out = frozen_hopfield(x, rand_proj, None, beta, prepared=prep, block_b=8)
    out = jax.block_until_ready(out)

    ref = frozen_hopfield_ref(x, rand_proj, embeddings, beta)
    assert out.shape == (B, embedding_dim)
    # bf16 MXU operands (x, proj, p, emb) -> compare against the f32 ref at relaxed tol.
    max_diff = float(jnp.max(jnp.abs(out - ref)))
    assert jnp.allclose(out, ref, atol=2e-2, rtol=2e-2), (
        f"mismatch vs. JAX reference, max abs diff = {max_diff}")

    print("KERNEL_OK")
</pallas_src>

<mosaic_0001>
module attributes {stable_mosaic.version = 11 : i64} {
  func.func @_frozen_hopfield_kernel(%arg0: i32, %arg1: i32, %arg2: memref<8x128xbf16, #tpu.memory_space<vmem>>, %arg3: memref<128x128xbf16, #tpu.memory_space<vmem>>, %arg4: memref<128x128xbf16, #tpu.memory_space<vmem>>, %arg5: memref<1x128xf32, #tpu.memory_space<vmem>>, %arg6: memref<8x128xf32, #tpu.memory_space<vmem>>, %arg7: memref<8x128xbf16, #tpu.memory_space<vmem>>, %arg8: memref<8x1xf32, #tpu.memory_space<vmem>>, %arg9: memref<8x128xf32, #tpu.memory_space<vmem>>) attributes {dimension_semantics = [#tpu.dimension_semantics<parallel>, #tpu.dimension_semantics<arbitrary>], iteration_bounds = array<i64: 2, 4>, scalar_prefetch = 0 : i64, scratch_operands = 3 : i64, tpu.core_type = #tpu.core_type<tc>, window_params = [{transform_indices = @transform_0, window_bounds = array<i64: 8, 128>}, {pipeline_mode = #tpu.pipeline_mode<synchronous>, transform_indices = @transform_1, window_bounds = array<i64: 128, 128>}, {transform_indices = @transform_2, window_bounds = array<i64: 128, 128>}, {transform_indices = @transform_3, window_bounds = array<i64: 1, 128>}, {transform_indices = @transform_4, window_bounds = array<i64: 8, 128>}]} {
    %c0_i32 = arith.constant 0 : i32
    %0 = arith.cmpi eq, %arg1, %c0_i32 : i32
    %1 = arith.extui %0 : i1 to i32
    %c0_i32_0 = arith.constant 0 : i32
    %2 = arith.cmpi ne, %1, %c0_i32_0 : i32
    scf.if %2 {
      %c0_20 = arith.constant 0 : index
      %c0_21 = arith.constant 0 : index
      %26 = vector.load %arg2[%c0_20, %c0_21] : memref<8x128xbf16, #tpu.memory_space<vmem>>, vector<8x128xbf16>
      %c0_22 = arith.constant 0 : index
      %c0_23 = arith.constant 0 : index
      %27 = vector.load %arg3[%c0_22, %c0_23] : memref<128x128xbf16, #tpu.memory_space<vmem>>, vector<128x128xbf16>
      %cst_24 = arith.constant dense<0.000000e+00> : vector<8x128xf32>
      %28 = tpu.matmul %26, %27, %cst_24 {dimension_numbers = #tpu.dot_dimension_numbers<[1], [1], [0], [0], [0, 0, 1, 0], [], []>} : vector<8x128xbf16>, vector<128x128xbf16>, vector<8x128xf32> -> vector<8x128xf32>
      %29 = arith.mulf %28, %28 : vector<8x128xf32>
      %cst_25 = arith.constant dense<0.000000e+00> : vector<8xf32>
      %30 = vector.multi_reduction <add>, %29, %cst_25 [1] : vector<8x128xf32> to vector<8xf32>
      %31 = vector.shape_cast %30 : vector<8xf32> to vector<8x1xf32>
      %cst_26 = arith.constant 9.99999996E-13 : f32
      %32 = vector.broadcast %cst_26 : f32 to vector<8x1xf32>
      %33 = arith.addf %31, %32 : vector<8x1xf32>
      %34 = math.rsqrt %33 : vector<8x1xf32>
      %cst_27 = arith.constant 2.000000e+00 : f32
      %35 = vector.broadcast %cst_27 : f32 to vector<8x1xf32>
      %36 = arith.mulf %35, %34 : vector<8x1xf32>
      %37 = vector.broadcast %36 : vector<8x1xf32> to vector<8x128xf32>
      %38 = arith.mulf %28, %37 : vector<8x128xf32>
      %39 = arith.truncf %38 : vector<8x128xf32> to vector<8x128xbf16>
      %c0_28 = arith.constant 0 : index
      %c0_29 = arith.constant 0 : index
      %40 = vector.load %arg7[%c0_28, %c0_29] : memref<8x128xbf16, #tpu.memory_space<vmem>>, vector<8x128xbf16>
      tpu.vector_store %arg7[%c0_28, %c0_29], %39 {strides = array<i32>} : memref<8x128xbf16, #tpu.memory_space<vmem>>, vector<8x128xbf16>,
      %cst_30 = arith.constant 0.000000e+00 : f32
      %41 = vector.broadcast %cst_30 : f32 to vector<8x1xf32>
      %c0_31 = arith.constant 0 : index
      %c0_32 = arith.constant 0 : index
      %42 = vector.load %arg8[%c0_31, %c0_32] : memref<8x1xf32, #tpu.memory_space<vmem>>, vector<8x1xf32>
      tpu.vector_store %arg8[%c0_31, %c0_32], %41 {strides = array<i32>} : memref<8x1xf32, #tpu.memory_space<vmem>>, vector<8x1xf32>,
      %cst_33 = arith.constant 0.000000e+00 : f32
      %43 = vector.broadcast %cst_33 : f32 to vector<8x128xf32>
      %c0_34 = arith.constant 0 : index
      %c0_35 = arith.constant 0 : index
      %44 = vector.load %arg9[%c0_34, %c0_35] : memref<8x128xf32, #tpu.memory_space<vmem>>, vector<8x128xf32>
      tpu.vector_store %arg9[%c0_34, %c0_35], %43 {strides = array<i32>} : memref<8x128xf32, #tpu.memory_space<vmem>>, vector<8x128xf32>,
    } else {
    }
    %c0 = arith.constant 0 : index
    %c0_1 = arith.constant 0 : index
    %3 = vector.load %arg7[%c0, %c0_1] : memref<8x128xbf16, #tpu.memory_space<vmem>>, vector<8x128xbf16>
    %c0_2 = arith.constant 0 : index
    %c0_3 = arith.constant 0 : index
    %4 = vector.load %arg4[%c0_2, %c0_3] : memref<128x128xbf16, #tpu.memory_space<vmem>>, vector<128x128xbf16>
    %cst = arith.constant dense<0.000000e+00> : vector<8x128xf32>
    %5 = tpu.matmul %3, %4, %cst {dimension_numbers = #tpu.dot_dimension_numbers<[1], [1], [0], [0], [0, 0, 1, 0], [], []>} : vector<8x128xbf16>, vector<128x128xbf16>, vector<8x128xf32> -> vector<8x128xf32>
    %c0_4 = arith.constant 0 : index
    %c0_5 = arith.constant 0 : index
    %6 = vector.load %arg5[%c0_4, %c0_5] : memref<1x128xf32, #tpu.memory_space<vmem>>, vector<1x128xf32>
    %7 = vector.broadcast %6 : vector<1x128xf32> to vector<8x128xf32>
    %8 = arith.mulf %5, %7 : vector<8x128xf32>
    %cst_6 = arith.constant 2.000000e+00 : f32
    %9 = vector.broadcast %cst_6 : f32 to vector<8x128xf32>
    %10 = arith.subf %8, %9 : vector<8x128xf32>
    %11 = math.exp %10 : vector<8x128xf32>
    %c0_7 = arith.constant 0 : index
    %c0_8 = arith.constant 0 : index
    %12 = vector.load %arg8[%c0_7, %c0_8] : memref<8x1xf32, #tpu.memory_space<vmem>>, vector<8x1xf32>
    %cst_9 = arith.constant dense<0.000000e+00> : vector<8xf32>
    %13 = vector.multi_reduction <add>, %11, %cst_9 [1] : vector<8x128xf32> to vector<8xf32>
    %14 = vector.shape_cast %13 : vector<8xf32> to vector<8x1xf32>
    %15 = arith.addf %12, %14 : vector<8x1xf32>
    %c0_10 = arith.constant 0 : index
    %c0_11 = arith.constant 0 : index
    %16 = vector.load %arg8[%c0_10, %c0_11] : memref<8x1xf32, #tpu.memory_space<vmem>>, vector<8x1xf32>
    tpu.vector_store %arg8[%c0_10, %c0_11], %15 {strides = array<i32>} : memref<8x1xf32, #tpu.memory_space<vmem>>, vector<8x1xf32>,
    %c0_12 = arith.constant 0 : index
    %c0_13 = arith.constant 0 : index
    %17 = vector.load %arg9[%c0_12, %c0_13] : memref<8x128xf32, #tpu.memory_space<vmem>>, vector<8x128xf32>
    %18 = arith.truncf %11 : vector<8x128xf32> to vector<8x128xbf16>
    %c0_14 = arith.constant 0 : index
    %c0_15 = arith.constant 0 : index
    %19 = vector.load %arg4[%c0_14, %c0_15] : memref<128x128xbf16, #tpu.memory_space<vmem>>, vector<128x128xbf16>
    %cst_16 = arith.constant dense<0.000000e+00> : vector<8x128xf32>
    %20 = tpu.matmul %18, %19, %cst_16 {dimension_numbers = #tpu.dot_dimension_numbers<[1], [0], [0], [1], [0, 0, 1, 1], [], []>} : vector<8x128xbf16>, vector<128x128xbf16>, vector<8x128xf32> -> vector<8x128xf32>
    %21 = arith.addf %17, %20 : vector<8x128xf32>
    %c0_17 = arith.constant 0 : index
    %c0_18 = arith.constant 0 : index
    %22 = vector.load %arg9[%c0_17, %c0_18] : memref<8x128xf32, #tpu.memory_space<vmem>>, vector<8x128xf32>
    tpu.vector_store %arg9[%c0_17, %c0_18], %21 {strides = array<i32>} : memref<8x128xf32, #tpu.memory_space<vmem>>, vector<8x128xf32>,
    %c3_i32 = arith.constant 3 : i32
    %23 = arith.cmpi eq, %arg1, %c3_i32 : i32
    %24 = arith.extui %23 : i1 to i32
    %c0_i32_19 = arith.constant 0 : i32
    %25 = arith.cmpi ne, %24, %c0_i32_19 : i32
    scf.if %25 {
      %c0_20 = arith.constant 0 : index
      %c0_21 = arith.constant 0 : index
      %26 = vector.load %arg8[%c0_20, %c0_21] : memref<8x1xf32, #tpu.memory_space<vmem>>, vector<8x1xf32>
      %c0_22 = arith.constant 0 : index
      %c0_23 = arith.constant 0 : index
      %27 = vector.load %arg9[%c0_22, %c0_23] : memref<8x128xf32, #tpu.memory_space<vmem>>, vector<8x128xf32>
      %28 = vector.broadcast %26 : vector<8x1xf32> to vector<8x128xf32>
      %29 = arith.divf %27, %28 : vector<8x128xf32>
      %c0_24 = arith.constant 0 : index
      %c0_25 = arith.constant 0 : index
      %30 = vector.load %arg6[%c0_24, %c0_25] : memref<8x128xf32, #tpu.memory_space<vmem>>, vector<8x128xf32>
      tpu.vector_store %arg6[%c0_24, %c0_25], %29 {strides = array<i32>} : memref<8x128xf32, #tpu.memory_space<vmem>>, vector<8x128xf32>,
    } else {
    }
    return
  }
  func.func @transform_0(%arg0: i32, %arg1: i32) -> (i32, i32) {
    %c0_i32 = arith.constant 0 : i32
    %c0_i32_0 = arith.constant 0 : i32
    return %arg0, %c0_i32 : i32, i32
  }
  func.func @transform_1(%arg0: i32, %arg1: i32) -> (i32, i32) {
    %c0_i32 = arith.constant 0 : i32
    %c0_i32_0 = arith.constant 0 : i32
    %c0_i32_1 = arith.constant 0 : i32
    return %c0_i32, %c0_i32_0 : i32, i32
  }
  func.func @transform_2(%arg0: i32, %arg1: i32) -> (i32, i32) {
    %c0_i32 = arith.constant 0 : i32
    %c0_i32_0 = arith.constant 0 : i32
    return %arg1, %c0_i32 : i32, i32
  }
  func.func @transform_3(%arg0: i32, %arg1: i32) -> (i32, i32) {
    %c0_i32 = arith.constant 0 : i32
    %c0_i32_0 = arith.constant 0 : i32
    return %c0_i32, %arg1 : i32, i32
  }
  func.func @transform_4(%arg0: i32, %arg1: i32) -> (i32, i32) {
    %c0_i32 = arith.constant 0 : i32
    %c0_i32_0 = arith.constant 0 : i32
    return %arg0, %c0_i32 : i32, i32
  }
}

</mosaic_0001>

<llo_original>
// kernel: tpu_custom_call.1
$region0: #{tpu_custom_call.1}
  #allocation0 [shape = 'u32[]', space=smem, size = 0x4, offset = 0x4, fixed_abs, tag = 'smem constant byte address 0x4 - core index']
  #allocation1 [shape = 'u32[72,128]{1,0:T(1,128)}', space=vmem, size = 0x9000, scoped, tag = 'internal scratch']
  #allocation2 [shape = 'bf16[8,128]{1,0:T(8,128)(2,1)}', space=vmem, size = 0x800, scoped, tag = 'scratch operand']
  #allocation3 [shape = 'f32[8,1]{1,0:T(8,128)}', space=vmem, size = 0x1000, scoped, tag = 'scratch operand']
  #allocation4 [shape = 'f32[8,128]{1,0:T(8,128)}', space=vmem, size = 0x1000, scoped, tag = 'scratch operand']
  %s0 = inlined_call_operand.hbm [shape: bf16[16,128], index: 0, kind: input, shape index: {}]
  %s1 = inlined_call_operand.hbm [shape: bf16[128,128], index: 1, kind: input, shape index: {}]
  %s2 = inlined_call_operand.hbm [shape: bf16[512,128], index: 2, kind: input, shape index: {}]
  %s3 = inlined_call_operand.hbm [shape: f32[1,512], index: 3, kind: input, shape index: {}]
  %s4 = inlined_call_operand.hbm [shape: f32[16,128], index: 4, kind: output, shape index: {}]
  %s5 = sld [smem:[#allocation0]]
  $region73: #{tpu_custom_call.1} parent=0
    _
  %s7 = ssub.s32 1, %s5
  %s8 = scalar_select 0, %s7, %s5
  $region1: #{tpu_custom_call.1} parent=0
    #allocation5 [shape = 'u8[4096]{0}', space=vmem, size = 0x1000, scoped, tag = 'input window, operand 0']
    #allocation6 [shape = 's32[2]{0}', space=sflag, size = 0x8, scoped, tag = 'scoped memory for tpu_custom_call.1']
    #allocation7 [shape = 's32[2]{0}', space=sflag, size = 0x8, scoped, tag = 'scoped memory for tpu_custom_call.1']
    #allocation8 [shape = 'u8[32768]{0}', space=vmem, size = 0x8000, scoped, tag = 'input window, operand 1, single buffered']
    #allocation9 [shape = 's32[1]{0}', space=sflag, size = 0x4, scoped, tag = 'scoped memory for tpu_custom_call.1']
    #allocation10 [shape = 'u8[65536]{0}', space=vmem, size = 0x10000, scoped, tag = 'input window, operand 2']
    #allocation11 [shape = 'u8[1024]{0}', space=vmem, size = 0x400, scoped, tag = 'input window, operand 3']
    #allocation12 [shape = 'u8[8192]{0}', space=vmem, size = 0x2000, scoped, tag = 'output window, operand 0']
    %9 = vsyncpa [#allocation6], 0
    %s10 = scalar_lea.sflag [#allocation6], 1
    %11 = vsyncpa %s10, 0
    %12 = vsyncpa [#allocation9], 0
    %13 = vsyncpa [#allocation7], 0
    %s14 = scalar_lea.sflag [#allocation7], 1
    %15 = vsyncpa %s14, 0
    loop: start=0, step=1, limit=10
    $region2: #{tpu_custom_call.1} parent=1 // loop_pre_header
      _
    $region3: #{tpu_custom_call.1} parent=1 // loop_header
      %s17 = sphi 0, %s21
      %p18 = scmp.ge.s32.totalorder %s17, 10
      %s24 = sphi 0, %s36
      %s25 = sphi 0, %s32
      %s26 = sphi 0, %s24
      %s27 = sphi 0, %s25
      %s28 = sphi 0, %s26
      %s29 = sphi 0, %s27
      %s39 = sphi 0, %s41
      %s42 = sphi 0, %s39
      %s43 = sphi 0, %s42
      %s59 = sphi 0, %s43
      %s63 = sphi 0, %s63
      %s65 = sphi 0, %s63
      %s66 = sphi 0, %s65
      %s80 = sphi 0, %s66
      %s86 = sphi 0, %s88
      %s89 = sphi 0, %s86
      %s90 = sphi 0, %s89
      %s106 = sphi 0, %s90
      %s112 = sphi 0, %s114
      %s115 = sphi 0, %s112
      %s116 = sphi 0, %s115
      %s132 = sphi 0, %s116
      %s138 = sphi 0, %s140
      %s141 = sphi 0, %s138
      %s142 = sphi 0, %s141
      %s158 = sphi 0, %s142
    $region4: #{tpu_custom_call.1} parent=1 // loop_header_branch
      %20 = sbr.rel (%p18) target = $region8
    $region5: #{tpu_custom_call.1} parent=1 // loop_body
      %s22 = ssub.s32 %s17, 1
      %s23 = ssub.s32 %s17, 2
      %s30 = sadd.s32 1, %s25
      %p31 = scmp.ge.s32.totalorder %s30, 4
      %s32 = scalar_select %p31, 0, %s30
      %s33 = sadd.s32 1, %s24
      %s34 = scalar_select %p31, %s33, %s24
      %p35 = scmp.ge.s32.totalorder %s34, 2
      %s36 = scalar_select %p35, 0, %s34
      %s37 = ssub.s32 %s24, %s36
      %p38 = scmp.eq.s32.totalorder %s37, 0
      %s40 = sadd.s32 %s39, 1
      %s41 = scalar_select %p38, %s39, %s40
      %p44 = pneg %p38
      %p45 = scmp.eq.s32.totalorder %s17, 7
      %p46 = por %p44, %p45
      %p47 = scmp.ne.s32.totalorder %s39, %s42
      %p48 = scmp.eq.s32.totalorder %s17, 0
      %p49 = por %p47, %p48
      %p50 = scmp.ne.s32.totalorder %s39, %s42
      %p51 = scmp.eq.s32.totalorder %s22, 7
      %p52 = por %p50, %p51
      %p53 = scmp.ne.s32.totalorder %s42, %s43
      %p54 = scmp.eq.s32.totalorder %s22, 0
      %p55 = por %p53, %p54
      %p56 = scmp.ne.s32.totalorder %s42, %s43
      %p57 = scmp.eq.s32.totalorder %s23, 7
      %p58 = por %p56, %p57
      %p60 = scmp.ne.s32.totalorder %s43, %s59
      %p61 = scmp.eq.s32.totalorder %s23, 0
      %p62 = por %p60, %p61
      %s64 = sadd.s32 %s63, 1
      %p67 = scmp.eq.s32.totalorder %s17, 7
      %p68 = scmp.ne.s32.totalorder %s63, %s65
      %p69 = scmp.eq.s32.totalorder %s17, 0
      %p70 = por %p68, %p69
      %p71 = scmp.ne.s32.totalorder %s63, %s65
      %p72 = scmp.eq.s32.totalorder %s22, 7
      %p73 = por %p71, %p72
      %p74 = scmp.ne.s32.totalorder %s65, %s66
      %p75 = scmp.eq.s32.totalorder %s22, 0
      %p76 = por %p74, %p75
      %p77 = scmp.ne.s32.totalorder %s65, %s66
      %p78 = scmp.eq.s32.totalorder %s23, 7
      %p79 = por %p77, %p78
      %p81 = scmp.ne.s32.totalorder %s66, %s80
      %p82 = scmp.eq.s32.totalorder %s23, 0
      %p83 = por %p81, %p82
      %s84 = ssub.s32 %s25, %s32
      %p85 = scmp.eq.s32.totalorder %s84, 0
      %s87 = sadd.s32 %s86, 1
      %s88 = scalar_select %p85, %s86, %s87
      %p91 = pneg %p85
      %p92 = scmp.eq.s32.totalorder %s17, 7
      %p93 = por %p91, %p92
      %p94 = scmp.ne.s32.totalorder %s86, %s89
      %p95 = scmp.eq.s32.totalorder %s17, 0
      %p96 = por %p94, %p95
      %p97 = scmp.ne.s32.totalorder %s86, %s89
      %p98 = scmp.eq.s32.totalorder %s22, 7
      %p99 = por %p97, %p98
      %p100 = scmp.ne.s32.totalorder %s89, %s90
      %p101 = scmp.eq.s32.totalorder %s22, 0
      %p102 = por %p100, %p101
      %p103 = scmp.ne.s32.totalorder %s89, %s90
      %p104 = scmp.eq.s32.totalorder %s23, 7
      %p105 = por %p103, %p104
      %p107 = scmp.ne.s32.totalorder %s90, %s106
      %p108 = scmp.eq.s32.totalorder %s23, 0
      %p109 = por %p107, %p108
      %s110 = ssub.s32 %s25, %s32
      %p111 = scmp.eq.s32.totalorder %s110, 0
      %s113 = sadd.s32 %s112, 1
      %s114 = scalar_select %p111, %s112, %s113
      %p117 = pneg %p111
      %p118 = scmp.eq.s32.totalorder %s17, 7
      %p119 = por %p117, %p118
      %p120 = scmp.ne.s32.totalorder %s112, %s115
      %p121 = scmp.eq.s32.totalorder %s17, 0
      %p122 = por %p120, %p121
      %p123 = scmp.ne.s32.totalorder %s112, %s115
      %p124 = scmp.eq.s32.totalorder %s22, 7
      %p125 = por %p123, %p124
      %p126 = scmp.ne.s32.totalorder %s115, %s116
      %p127 = scmp.eq.s32.totalorder %s22, 0
      %p128 = por %p126, %p127
      %p129 = scmp.ne.s32.totalorder %s115, %s116
      %p130 = scmp.eq.s32.totalorder %s23, 7
      %p131 = por %p129, %p130
      %p133 = scmp.ne.s32.totalorder %s116, %s132
      %p134 = scmp.eq.s32.totalorder %s23, 0
      %p135 = por %p133, %p134
      %s136 = ssub.s32 %s24, %s36
      %p137 = scmp.eq.s32.totalorder %s136, 0
      %s139 = sadd.s32 %s138, 1
      %s140 = scalar_select %p137, %s138, %s139
      %p143 = pneg %p137
      %p144 = scmp.eq.s32.totalorder %s17, 7
      %p145 = por %p143, %p144
      %p146 = scmp.ne.s32.totalorder %s138, %s141
      %p147 = scmp.eq.s32.totalorder %s17, 0
      %p148 = por %p146, %p147
      %p149 = scmp.ne.s32.totalorder %s138, %s141
      %p150 = scmp.eq.s32.totalorder %s22, 7
      %p151 = por %p149, %p150
      %p152 = scmp.ne.s32.totalorder %s141, %s142
      %p153 = scmp.eq.s32.totalorder %s22, 0
      %p154 = por %p152, %p153
      %p155 = scmp.ne.s32.totalorder %s141, %s142
      %p156 = scmp.eq.s32.totalorder %s23, 7
      %p157 = por %p155, %p156
      %p159 = scmp.ne.s32.totalorder %s142, %s158
      %p160 = scmp.eq.s32.totalorder %s23, 0
      %p161 = por %p159, %p160
      %p162 = scmp.le.s32.totalorder 1, %s17
      %p163 = scmp.lt.s32.totalorder %s17, 9
      %p164 = pnand %p162, %p163
      %p165 = pneg %p164
      // Predicated region
      $region9: #{tpu_custom_call.1} parent=5 // pred_check
        _
      $region10: #{tpu_custom_call.1} parent=5 // pred_check_branch
        %167 = sbr.rel (%p164) target = $region12
      $region11: #{tpu_custom_call.1} parent=5 // pred_region
        %s168 = ssub.s32 %s17, 1
        // Predicated region
        $region13: #{tpu_custom_call.1} parent=11 // pred_check
          %p169 = pneg %p76
        $region14: #{tpu_custom_call.1} parent=11 // pred_check_branch
          %171 = sbr.rel (%p169) target = $region16
        $region15: #{tpu_custom_call.1} parent=11 // pred_region
          %173 = vsyncadd [#allocation9], 0
          %s174 = sshll.u32 %s1, 4
          %s175 = int_to_ptr.hbm [resolvable:$true] %s174
          %s176 = sshll.u32 [#allocation8], 4
          %s177 = int_to_ptr.vmem [resolvable:$true] %s176
          %182 = dma.hbm_to_vmem [thread:$0]  %s175, 1024, %s177, [#allocation9], 64, 64, 4
        $region16: #{tpu_custom_call.1} parent=11 // pred_fallthru
          _
      $region12: #{tpu_custom_call.1} parent=5 // pred_fallthru
        _
      %p183 = scmp.lt.s32.totalorder %s17, 8
      // Predicated region
      $region17: #{tpu_custom_call.1} parent=5 // pred_check
        %p184 = pneg %p183
      $region18: #{tpu_custom_call.1} parent=5 // pred_check_branch
        %186 = sbr.rel (%p184) target = $region20
      $region19: #{tpu_custom_call.1} parent=5 // pred_region
        // Predicated region
        $region21: #{tpu_custom_call.1} parent=19 // pred_check
          %p187 = pneg %p49
        $region22: #{tpu_custom_call.1} parent=19 // pred_check_branch
          %189 = sbr.rel (%p187) target = $region24
        $region23: #{tpu_custom_call.1} parent=19 // pred_region
          %s190 = sand.u32 %s17, 1
          %s191 = scalar_lea.sflag [#allocation6], %s190
          %s192 = sand.u32 %s39, 1
          %s193 = smul.addr %s192, 4
          %s194 = scalar_lea.vmem [#allocation5], %s193
          %196 = vsyncadd %s191, 0
          %s197 = smul.addr %s24, 4
          %s198 = scalar_lea.hbm %s0, %s197
          %s200 = sshll.u32 %s198, 4
          %s201 = int_to_ptr.hbm [resolvable:$true] %s200
          %s202 = sshll.u32 %s194, 4
          %s203 = int_to_ptr.vmem [resolvable:$true] %s202
          %205 = dma.hbm_to_vmem [thread:$0]  %s201, 64, %s203, %s191
        $region24: #{tpu_custom_call.1} parent=19 // pred_fallthru
          _
        // Predicated region
        $region25: #{tpu_custom_call.1} parent=19 // pred_check
          %p206 = pneg %p96
        $region26: #{tpu_custom_call.1} parent=19 // pred_check_branch
          %208 = sbr.rel (%p206) target = $region28
        $region27: #{tpu_custom_call.1} parent=19 // pred_region
          %s209 = sand.u32 %s17, 1
          %s210 = scalar_lea.sflag [#allocation6], %s209
          %s211 = sand.u32 %s86, 1
          %s212 = smul.addr %s211, 64
          %s213 = scalar_lea.vmem [#allocation10], %s212
          %s214 = smul.u32 16, %s25
          %216 = vsyncadd %s210, 0
          %s217 = smul.addr %s214, 4
          %s218 = scalar_lea.hbm %s2, %s217
          %s219 = sshll.u32 %s218, 4
          %s220 = int_to_ptr.hbm [resolvable:$true] %s219
          %s221 = sshll.u32 %s213, 4
          %s222 = int_to_ptr.vmem [resolvable:$true] %s221
          %227 = dma.hbm_to_vmem [thread:$0]  %s220, 1024, %s222, %s210, 64, 64, 4
        $region28: #{tpu_custom_call.1} parent=19 // pred_fallthru
          _
        // Predicated region
        $region29: #{tpu_custom_call.1} parent=19 // pred_check
          %p228 = pneg %p122
        $region30: #{tpu_custom_call.1} parent=19 // pred_check_branch
          %230 = sbr.rel (%p228) target = $region32
        $region31: #{tpu_custom_call.1} parent=19 // pred_region
          %s231 = sand.u32 %s17, 1
          %s232 = scalar_lea.sflag [#allocation6], %s231
          %s233 = sand.u32 %s112, 1
          %s234 = scalar_lea.vmem [#allocation11], %s233
          %236 = vsyncadd %s232, 0
          %s237 = scalar_lea.hbm %s3, %s25
          %s239 = sshll.u32 %s237, 4
          %s240 = int_to_ptr.hbm [resolvable:$true] %s239
          %s241 = sshll.u32 %s234, 4
          %s242 = int_to_ptr.vmem [resolvable:$true] %s241
          %244 = dma.hbm_to_vmem [thread:$0]  %s240, 16, %s242, %s232
        $region32: #{tpu_custom_call.1} parent=19 // pred_fallthru
          _
      $region20: #{tpu_custom_call.1} parent=5 // pred_fallthru
        _
      %p245 = scmp.le.s32.totalorder 1, %s17
      %p246 = scmp.lt.s32.totalorder %s17, 9
      %p247 = pnand %p245, %p246
      %p248 = pneg %p247
      // Predicated region
      $region33: #{tpu_custom_call.1} parent=5 // pred_check
        _
      $region34: #{tpu_custom_call.1} parent=5 // pred_check_branch
        %250 = sbr.rel (%p247) target = $region36
      $region35: #{tpu_custom_call.1} parent=5 // pred_region
        %s251 = ssub.s32 %s17, 1
        %s252 = sand.u32 %s22, 1
        %s253 = scalar_lea.sflag [#allocation6], %s252
        %s254 = sand.u32 %s42, 1
        %s255 = smul.addr %s254, 4
        %s256 = scalar_lea.vmem [#allocation5], %s255
        // Predicated region
        $region37: #{tpu_custom_call.1} parent=35 // pred_check
          %p257 = pneg %p55
        $region38: #{tpu_custom_call.1} parent=35 // pred_check_branch
          %259 = sbr.rel (%p257) target = $region40
        $region39: #{tpu_custom_call.1} parent=35 // pred_region
          %261 = dma.done %s253, 64
        $region40: #{tpu_custom_call.1} parent=35 // pred_fallthru
          _
        // Predicated region
        $region41: #{tpu_custom_call.1} parent=35 // pred_check
          %p262 = pneg %p76
        $region42: #{tpu_custom_call.1} parent=35 // pred_check_branch
          %264 = sbr.rel (%p262) target = $region44
        $region43: #{tpu_custom_call.1} parent=35 // pred_region
          %266 = dma.done [#allocation9], 1024
        $region44: #{tpu_custom_call.1} parent=35 // pred_fallthru
          _
        %s267 = sand.u32 %s22, 1
        %s268 = scalar_lea.sflag [#allocation6], %s267
        %s269 = sand.u32 %s89, 1
        %s270 = smul.addr %s269, 64
        %s271 = scalar_lea.vmem [#allocation10], %s270
        // Predicated region
        $region45: #{tpu_custom_call.1} parent=35 // pred_check
          %p272 = pneg %p102
        $region46: #{tpu_custom_call.1} parent=35 // pred_check_branch
          %274 = sbr.rel (%p272) target = $region48
        $region47: #{tpu_custom_call.1} parent=35 // pred_region
          %276 = dma.done %s268, 1024
        $region48: #{tpu_custom_call.1} parent=35 // pred_fallthru
          _
        %s277 = sand.u32 %s22, 1
        %s278 = scalar_lea.sflag [#allocation6], %s277
        %s279 = sand.u32 %s115, 1
        %s280 = scalar_lea.vmem [#allocation11], %s279
        // Predicated region
        $region49: #{tpu_custom_call.1} parent=35 // pred_check
          %p281 = pneg %p128
        $region50: #{tpu_custom_call.1} parent=35 // pred_check_branch
          %283 = sbr.rel (%p281) target = $region52
        $region51: #{tpu_custom_call.1} parent=35 // pred_region
          %285 = dma.done %s278, 16
        $region52: #{tpu_custom_call.1} parent=35 // pred_fallthru
          _
        %s286 = sand.u32 %s22, 1
        %s287 = scalar_lea.sflag [#allocation6], %s286
        %s288 = sand.u32 %s42, 1
        %s289 = smul.addr %s288, 4
        %s290 = scalar_lea.vmem [#allocation5], %s289
        %p291 = pneg %p55
        %p292 = pneg %p52
        %p293 = pneg %p76
        %p294 = pneg %p73
        %s295 = sand.u32 %s22, 1
        %s296 = scalar_lea.sflag [#allocation6], %s295
        %s297 = sand.u32 %s89, 1
        %s298 = smul.addr %s297, 64
        %s299 = scalar_lea.vmem [#allocation10], %s298
        %p300 = pneg %p102
        %p301 = pneg %p99
        %s302 = sand.u32 %s22, 1
        %s303 = scalar_lea.sflag [#allocation6], %s302
        %s304 = sand.u32 %s115, 1
        %s305 = scalar_lea.vmem [#allocation11], %s304
        %p306 = pneg %p128
        %p307 = pneg %p125
        %p308 = pneg %p154
        %p309 = pneg %p151
        %s310 = sand.u32 %s141, 1
        %s311 = scalar_lea.sflag [#allocation7], %s310
        %s312 = sand.u32 %s141, 1
        %s313 = smul.addr %s312, 8
        %s314 = scalar_lea.vmem [#allocation12], %s313
        %s315 = smul.u32 16, %s27
        %p316 = scmp.eq.s32.totalorder %s27, 0
        // Predicated region
        $region53: #{tpu_custom_call.1} parent=35 // pred_check
          %p317 = pneg %p316
        $region54: #{tpu_custom_call.1} parent=35 // pred_check_branch
          %319 = sbr.rel (%p317) target = $region56
        $region55: #{tpu_custom_call.1} parent=35 // pred_region
          %v320 = vld [vmem:[%s256] sm:$0xf]
          %v321 = vld [vmem:[#allocation8] sm:$0xf]
          %v322 = vld [vmem:[#allocation8 + $0x4] sm:$0xf]
          %v323 = vld [vmem:[#allocation8 + $0x8] sm:$0xf]
          %v324 = vld [vmem:[#allocation8 + $0xc] sm:$0xf]
          %v325 = vld [vmem:[#allocation8 + $0x10] sm:$0xf]
          %v326 = vld [vmem:[#allocation8 + $0x14] sm:$0xf]
          %v327 = vld [vmem:[#allocation8 + $0x18] sm:$0xf]
          %v328 = vld [vmem:[#allocation8 + $0x1c] sm:$0xf]
          %v329 = vld [vmem:[#allocation8 + $0x20] sm:$0xf]
          %v330 = vld [vmem:[#allocation8 + $0x24] sm:$0xf]
          %v331 = vld [vmem:[#allocation8 + $0x28] sm:$0xf]
          %v332 = vld [vmem:[#allocation8 + $0x2c] sm:$0xf]
          %v333 = vld [vmem:[#allocation8 + $0x30] sm:$0xf]
          %v334 = vld [vmem:[#allocation8 + $0x34] sm:$0xf]
          %v335 = vld [vmem:[#allocation8 + $0x38] sm:$0xf]
          %v336 = vld [vmem:[#allocation8 + $0x3c] sm:$0xf]
          %v353 = vunpack.c.l.b16 %v321
          %v354 = vunpack.c.l.b16 %v322
          %v355 = vunpack.c.l.b16 %v323
          %v356 = vunpack.c.l.b16 %v324
          %v357 = vunpack.c.l.b16 %v325
          %v358 = vunpack.c.l.b16 %v326
          %v359 = vunpack.c.l.b16 %v327
          %v360 = vunpack.c.l.b16 %v328
          %v361 = vunpack.c.l.b16 %v329
          %v362 = vunpack.c.l.b16 %v330
          %v363 = vunpack.c.l.b16 %v331
          %v364 = vunpack.c.l.b16 %v332
          %v365 = vunpack.c.l.b16 %v333
          %v366 = vunpack.c.l.b16 %v334
          %v367 = vunpack.c.l.b16 %v335
          %v368 = vunpack.c.l.b16 %v336
          %v369 = vpack.c.b16 %v354, %v353
          %v370 = vpack.c.b16 %v356, %v355
          %v371 = vpack.c.b16 %v358, %v357
          %v372 = vpack.c.b16 %v360, %v359
          %v373 = vpack.c.b16 %v362, %v361
          %v374 = vpack.c.b16 %v364, %v363
          %v375 = vpack.c.b16 %v366, %v365
          %v376 = vpack.c.b16 %v368, %v367
          %385 = vmatpush.bf16.xpose.msra.mxu0 %v376
          %386 = vmatpush.bf16.xpose.msra.mxu0 %v375
          %387 = vmatpush.bf16.xpose.msra.mxu0 %v374
          %388 = vmatpush.bf16.xpose.msra.mxu0 %v373
          %389 = vmatpush.bf16.xpose.msra.mxu0 %v372
          %390 = vmatpush.bf16.xpose.msra.mxu0 %v371
          %391 = vmatpush.bf16.xpose.msra.mxu0 %v370
          %392 = vmatpush.bf16.xpose.msra.mxu0 %v369
          %393 = vmatmul.bf16.gmra.mxu0 %v320
          %v394 = vpop.f32.mrf.mxu0
          %v395 = vadd.f32 0.0, %v394
          %v396 = vpop.f32.mrf.mxu0
          %397 = vdwg.mxu0
          %v398 = vmul.f32 %v395, %v395
          %399 = vadd.xlane.f32.xlu0 %v398
          %v400 = vpop.xlane.xlu0 %399
          %v401 = vadd.f32 %v400, 1e-12
          %v402 = vrsqrt.pop %v401
          %v403 = vmul.f32 %v402, %v401
          %v404 = vmul.f32 %v403, %v402
          %v405 = vmul.f32 0.5, %v404
          %v406 = vsub.f32 1.5, %v405
          %v407 = vmul.f32 %v402, %v406
          %vm408 = vweird.f32 %v401
          %vm409 = vweird.f32 %v402
          %vm410 = vmor %vm408, %vm409
          %v411 = vsel %vm410, %v402, %v407
          %v412 = vmul.f32 %v411, 2.0
          %v413 = vmul.f32 %v395, %v412
          %v414 = vpack.c.bf16 %v413, %v413
          %415 = vst [vmem:[#allocation2] sm:$0xf] %v414
          %vm416 = vcmask 7168
          %417 = vst.msk [vmem:[#allocation3] sm:$0xff] %vm416, 0.0
          %418 = vst [vmem:[#allocation4] sm:$0xff] 0.0
        $region56: #{tpu_custom_call.1} parent=35 // pred_fallthru
          _
        %v419 = vld [vmem:[#allocation2] sm:$0xf]
        %v420 = vld [vmem:[%s271] sm:$0xf]
        %v421 = vld [vmem:[%s271 + $0x4] sm:$0xf]
        %v422 = vld [vmem:[%s271 + $0x8] sm:$0xf]
        %v423 = vld [vmem:[%s271 + $0xc] sm:$0xf]
        %v424 = vld [vmem:[%s271 + $0x10] sm:$0xf]
        %v425 = vld [vmem:[%s271 + $0x14] sm:$0xf]
        %v426 = vld [vmem:[%s271 + $0x18] sm:$0xf]
        %v427 = vld [vmem:[%s271 + $0x1c] sm:$0xf]
        %v428 = vld [vmem:[%s271 + $0x20] sm:$0xf]
        %v429 = vld [vmem:[%s271 + $0x24] sm:$0xf]
        %v430 = vld [vmem:[%s271 + $0x28] sm:$0xf]
        %v431 = vld [vmem:[%s271 + $0x2c] sm:$0xf]
        %v432 = vld [vmem:[%s271 + $0x30] sm:$0xf]
        %v433 = vld [vmem:[%s271 + $0x34] sm:$0xf]
        %v434 = vld [vmem:[%s271 + $0x38] sm:$0xf]
        %v435 = vld [vmem:[%s271 + $0x3c] sm:$0xf]
        %v452 = vunpack.c.l.b16 %v420
        %v453 = vunpack.c.l.b16 %v421
        %v454 = vunpack.c.l.b16 %v422
        %v455 = vunpack.c.l.b16 %v423
        %v456 = vunpack.c.l.b16 %v424
        %v457 = vunpack.c.l.b16 %v425
        %v458 = vunpack.c.l.b16 %v426
        %v459 = vunpack.c.l.b16 %v427
        %v460 = vunpack.c.l.b16 %v428
        %v461 = vunpack.c.l.b16 %v429
        %v462 = vunpack.c.l.b16 %v430
        %v463 = vunpack.c.l.b16 %v431
        %v464 = vunpack.c.l.b16 %v432
        %v465 = vunpack.c.l.b16 %v433
        %v466 = vunpack.c.l.b16 %v434
        %v467 = vunpack.c.l.b16 %v435
        %v468 = vpack.c.b16 %v453, %v452
        %v469 = vpack.c.b16 %v455, %v454
        %v470 = vpack.c.b16 %v457, %v456
        %v471 = vpack.c.b16 %v459, %v458
        %v472 = vpack.c.b16 %v461, %v460
        %v473 = vpack.c.b16 %v463, %v462
        %v474 = vpack.c.b16 %v465, %v464
        %v475 = vpack.c.b16 %v467, %v466
        %484 = vmatpush.bf16.xpose.msra.mxu0 %v475
        %485 = vmatpush.bf16.xpose.msra.mxu0 %v474
        %486 = vmatpush.bf16.xpose.msra.mxu0 %v473
        %487 = vmatpush.bf16.xpose.msra.mxu0 %v472
        %488 = vmatpush.bf16.xpose.msra.mxu0 %v471
        %489 = vmatpush.bf16.xpose.msra.mxu0 %v470
        %490 = vmatpush.bf16.xpose.msra.mxu0 %v469
        %491 = vmatpush.bf16.xpose.msra.mxu0 %v468
        %492 = vmatmul.bf16.gmra.mxu0 %v419
        %v493 = vpop.f32.mrf.mxu0
        %v494 = vadd.f32 0.0, %v493
        %v495 = vpop.f32.mrf.mxu0
        %496 = vdwg.mxu0
        %v497 = vld [vmem:[%s280] sm:$0x1]
        %v499 = vperm.slane %v497, 0
        %v501 = vmul.f32 %v494, %v499
        %v502 = vsub.f32 %v501, 2.0
        %v503 = vmul.f32 %v502, 1.442695
        %v504 = vpow.pop %v503
        %v505 = vld [vmem:[#allocation3] sm:$0xff]
        %506 = vadd.xlane.f32.xlu0 %v504
        %v507 = vpop.xlane.xlu0 %506
        %v508 = vadd.f32 %v505, %v507
        %vm509 = vcmask 7168
        %510 = vst.msk [vmem:[#allocation3] sm:$0xff] %vm509, %v508
        %v511 = vld [vmem:[#allocation4] sm:$0xff]
        %v512 = vpack.c.bf16 %v504, %v504
        %v513 = vld [vmem:[%s271] sm:$0xf]
        %v514 = vld [vmem:[%s271 + $0x4] sm:$0xf]
        %v515 = vld [vmem:[%s271 + $0x8] sm:$0xf]
        %v516 = vld [vmem:[%s271 + $0xc] sm:$0xf]
        %v517 = vld [vmem:[%s271 + $0x10] sm:$0xf]
        %v518 = vld [vmem:[%s271 + $0x14] sm:$0xf]
        %v519 = vld [vmem:[%s271 + $0x18] sm:$0xf]
        %v520 = vld [vmem:[%s271 + $0x1c] sm:$0xf]
        %v521 = vld [vmem:[%s271 + $0x20] sm:$0xf]
        %v522 = vld [vmem:[%s271 + $0x24] sm:$0xf]
        %v523 = vld [vmem:[%s271 + $0x28] sm:$0xf]
        %v524 = vld [vmem:[%s271 + $0x2c] sm:$0xf]
        %v525 = vld [vmem:[%s271 + $0x30] sm:$0xf]
        %v526 = vld [vmem:[%s271 + $0x34] sm:$0xf]
        %v527 = vld [vmem:[%s271 + $0x38] sm:$0xf]
        %v528 = vld [vmem:[%s271 + $0x3c] sm:$0xf]
        %v545 = vunpack.c.l.b16 %v513
        %v546 = vunpack.c.l.b16 %v514
        %v547 = vunpack.c.l.b16 %v515
        %v548 = vunpack.c.l.b16 %v516
        %v549 = vunpack.c.l.b16 %v517
        %v550 = vunpack.c.l.b16 %v518
        %v551 = vunpack.c.l.b16 %v519
        %v552 = vunpack.c.l.b16 %v520
        %v553 = vunpack.c.l.b16 %v521
        %v554 = vunpack.c.l.b16 %v522
        %v555 = vunpack.c.l.b16 %v523
        %v556 = vunpack.c.l.b16 %v524
        %v557 = vunpack.c.l.b16 %v525
        %v558 = vunpack.c.l.b16 %v526
        %v559 = vunpack.c.l.b16 %v527
        %v560 = vunpack.c.l.b16 %v528
        %v561 = vpack.c.b16 %v546, %v545
        %v562 = vpack.c.b16 %v548, %v547
        %v563 = vpack.c.b16 %v550, %v549
        %v564 = vpack.c.b16 %v552, %v551
        %v565 = vpack.c.b16 %v554, %v553
        %v566 = vpack.c.b16 %v556, %v555
        %v567 = vpack.c.b16 %v558, %v557
        %v568 = vpack.c.b16 %v560, %v559
        %577 = vmatpush.bf16.msra.mxu0 %v568
        %578 = vmatpush.bf16.msra.mxu0 %v567
        %579 = vmatpush.bf16.msra.mxu0 %v566
        %580 = vmatpush.bf16.msra.mxu0 %v565
        %581 = vmatpush.bf16.msra.mxu0 %v564
        %582 = vmatpush.bf16.msra.mxu0 %v563
        %583 = vmatpush.bf16.msra.mxu0 %v562
        %584 = vmatpush.bf16.msra.mxu0 %v561
        %585 = vmatmul.bf16.gmra.mxu0 %v512
        %v586 = vpop.f32.mrf.mxu0
        %v587 = vadd.f32 0.0, %v586
        %v588 = vpop.f32.mrf.mxu0
        %589 = vdwg.mxu0
        %v590 = vadd.f32 %v511, %v587
        %591 = vst [vmem:[#allocation4] sm:$0xff] %v590
        %p592 = scmp.eq.s32.totalorder %s27, 3
        // Predicated region
        $region57: #{tpu_custom_call.1} parent=35 // pred_check
          %p593 = pneg %p592
        $region58: #{tpu_custom_call.1} parent=35 // pred_check_branch
          %595 = sbr.rel (%p593) target = $region60
        $region59: #{tpu_custom_call.1} parent=35 // pred_region
          %v596 = vld [vmem:[#allocation3] sm:$0xff]
          %v597 = vld [vmem:[#allocation4] sm:$0xff]
          %599 = vset.pattern.permute.xlu0 0
          %600 = vperm.xlu0 %599, %v596
          %v601 = vpop.permute.xlu0 %600
          %v603 = vrcp.pop %v601
          %v604 = vmul.f32 %v601, %v603
          %v605 = vsub.f32 1.0, %v604
          %v606 = vmul.f32 %v603, %v605
          %v607 = vadd.f32 %v603, %v606
          %vm608 = vweird.f32 %v601
          %vm609 = vweird.f32 %v603
          %vm610 = vmor %vm608, %vm609
          %v611 = vsel %vm610, %v603, %v607
          %v612 = vand.u32 2147483647, %v601
          %vm613 = vcmp.eq.f32.partialorder %v612, 8.507059e+37
          %v614 = vand.u32 %v601, 2147483648
          %v615 = vor.u32 1.1754944e-38, %v614
          %v616 = vsel %vm613, %v615, %v611
          %v617 = vmul.f32 %v597, %v616
          %618 = vst [vmem:[%s314] sm:$0xff] %v617
        $region60: #{tpu_custom_call.1} parent=35 // pred_fallthru
          _
        %s619 = sand.u32 %s141, 1
        %s620 = scalar_lea.sflag [#allocation7], %s619
        %s621 = sand.u32 %s141, 1
        %s622 = smul.addr %s621, 8
        %s623 = scalar_lea.vmem [#allocation12], %s622
        // Predicated region
        $region61: #{tpu_custom_call.1} parent=35 // pred_check
          %p624 = pneg %p151
        $region62: #{tpu_custom_call.1} parent=35 // pred_check_branch
          %626 = sbr.rel (%p624) target = $region64
        $region63: #{tpu_custom_call.1} parent=35 // pred_region
          %628 = vsyncadd %s620, 0
          %s629 = smul.addr %s26, 8
          %s630 = scalar_lea.hbm %s4, %s629
          %s632 = sshll.u32 %s623, 4
          %s633 = int_to_ptr.vmem [resolvable:$true] %s632
          %s634 = sshll.u32 %s630, 4
          %s635 = int_to_ptr.hbm [resolvable:$true] %s634
          %637 = dma.vmem_to_hbm [thread:$0]  %s633, 128, %s635, %s620
        $region64: #{tpu_custom_call.1} parent=35 // pred_fallthru
          _
      $region36: #{tpu_custom_call.1} parent=5 // pred_fallthru
        _
      %p638 = scmp.le.s32.totalorder 2, %s17
      // Predicated region
      $region65: #{tpu_custom_call.1} parent=5 // pred_check
        %p639 = pneg %p638
      $region66: #{tpu_custom_call.1} parent=5 // pred_check_branch
        %641 = sbr.rel (%p639) target = $region68
      $region67: #{tpu_custom_call.1} parent=5 // pred_region
        %s642 = ssub.s32 %s17, 2
        // Predicated region
        $region69: #{tpu_custom_call.1} parent=67 // pred_check
          %p643 = pneg %p157
        $region70: #{tpu_custom_call.1} parent=67 // pred_check_branch
          %645 = sbr.rel (%p643) target = $region72
        $region71: #{tpu_custom_call.1} parent=67 // pred_region
          %s646 = sand.u32 %s142, 1
          %s647 = scalar_lea.sflag [#allocation7], %s646
          %s648 = sand.u32 %s142, 1
          %s649 = smul.addr %s648, 8
          %s650 = scalar_lea.vmem [#allocation12], %s649
          %652 = dma.done %s647, 128
        $region72: #{tpu_custom_call.1} parent=67 // pred_fallthru
          _
      $region68: #{tpu_custom_call.1} parent=5 // pred_fallthru
        _
    $region6: #{tpu_custom_call.1} parent=1 // loop_footer
      %s21 = sadd.s32 1, %s17
    $region7: #{tpu_custom_call.1} parent=1 // loop_footer_branch
      %16 = sbr.rel target = $region3
    $region8: #{tpu_custom_call.1} parent=1 // loop_exit
      _
    %653 = vsyncpa [#allocation6], 1
    %s654 = scalar_lea.sflag [#allocation6], 1
    %655 = vsyncpa %s654, 1
    %656 = vsyncpa [#allocation9], 1
    %657 = vsyncpa [#allocation7], 1
    %s658 = scalar_lea.sflag [#allocation7], 1
    %659 = vsyncpa %s658, 1

</llo_original>
